<compile_context>
chip_gen: v6e
topology: v6e:2x2x1
jax: 0.10.0
libtpu: 0.0.40
codegen_flags: <defaults>
</compile_context>

<pallas_src>
import jax
import jax.numpy as jnp
from jax.experimental import pallas as pl
from jax.experimental.pallas import tpu as pltpu

EPS = 1e-5  # nn.BatchNorm2d default eps


# --------------------------------------------------------------------------- #
# Tiling helpers
# --------------------------------------------------------------------------- #
def _vmem_capacity_bytes():
    """Per-core VMEM capacity; conservative fallback (v7x) if the query fails."""
    try:
        info = pltpu.get_tpu_info()
        cap = int(getattr(info, "vmem_capacity_bytes", 0))
        if cap > 0:
            return cap
    except Exception:
        pass
    return 64 << 20


def _choose_hw_tile(hw, c, itemsize, target_bytes):
    """Lane tile along HW. Returns a multiple of 128 (tail handled by a cdiv grid
    plus masking / dropped OOB stores), unless the whole extent fits one tile, in
    which case the full extent is used (allowed even when not a multiple of 128)."""
    cap_elems = max(128, target_bytes // max(1, c * itemsize))
    cap = max(128, (cap_elems // 128) * 128)
    if hw <= cap:
        return hw
    # Prefer an exact divisor near the cap (no tail tile); otherwise accept a tail.
    t = cap
    while t >= max(128, cap // 2):
        if hw % t == 0:
            return t
        t -= 128
    return cap


def _choose_c_block(c, itemsize):
    """Channel-block size for the stats pass (leading 'parallel' grid axis, so a
    megacore chip's TensorCores can each own a contiguous set of channels). Must
    be a multiple of the sublane packing for the dtype, or the full extent."""
    sub = 8 * max(1, 4 // itemsize)  # 8 (f32) / 16 (bf16) / 32 (int8)
    if c % sub != 0 or c < 2 * sub:
        return c
    half = (c // 2 // sub) * sub
    if half >= sub and c % half == 0:
        return half
    return sub


# --------------------------------------------------------------------------- #
# Fused single-call path (activation resident in VMEM): 2x HBM traffic
# --------------------------------------------------------------------------- #
def _fused_bn_relu(x3, gamma2d, beta2d, eps, vmem_limit):
    N, C, HW = x3.shape
    itemsize = jnp.dtype(x3.dtype).itemsize
    inv_count = 1.0 / float(N * HW)
    compute_dtype = jnp.bfloat16 if x3.dtype == jnp.bfloat16 else jnp.float32

    def kernel(x_ref, g_ref, b_ref, o_ref):
        # -- batch statistics over (N, HW) per channel --
        def stats_body(n, carry):
            s, sq = carry
            xn = x_ref[n].astype(jnp.float32)                # (C, HW)
            s = s + jnp.sum(xn, axis=-1, keepdims=True)
            sq = sq + jnp.sum(xn * xn, axis=-1, keepdims=True)
            return s, sq

        zeros = jnp.zeros((C, 1), jnp.float32)
        s, sq = jax.lax.fori_loop(0, N, stats_body, (zeros, zeros))
        mean = s * inv_count
        var = sq * inv_count - mean * mean                   # biased (training BN)
        inv_std = jax.lax.rsqrt(jnp.maximum(var, 0.0) + eps)
        scale_f32 = g_ref[...] * inv_std
        bias_f32 = b_ref[...] - mean * scale_f32
        scale = scale_f32.astype(compute_dtype)
        bias = bias_f32.astype(compute_dtype)

        # -- normalize + affine + ReLU --
        def norm_body(n, carry):
            y = x_ref[n].astype(compute_dtype) * scale + bias
            o_ref[n] = jnp.maximum(y, 0).astype(o_ref.dtype)
            return carry

        jax.lax.fori_loop(0, N, norm_body, jnp.int32(0))

    cost = pl.CostEstimate(flops=6 * N * C * HW,
                           transcendentals=C,
                           bytes_accessed=2 * N * C * HW * itemsize)

    return pl.pallas_call(
        kernel,
        out_shape=jax.ShapeDtypeStruct((N, C, HW), x3.dtype),
        in_specs=[pl.BlockSpec(memory_space=pltpu.MemorySpace.VMEM)] * 3,
        out_specs=pl.BlockSpec(memory_space=pltpu.MemorySpace.VMEM),
        compiler_params=pltpu.CompilerParams(vmem_limit_bytes=vmem_limit),
        cost_estimate=cost,
    )(x3, gamma2d, beta2d)


# --------------------------------------------------------------------------- #
# Streaming two-pass path: 3x HBM traffic, arbitrary activation size
# --------------------------------------------------------------------------- #
def _two_pass_bn_relu(x3, gamma2d, beta2d, eps, vmem_limit,
                      pass1_target, pass2_target):
    N, C, HW = x3.shape
    itemsize = jnp.dtype(x3.dtype).itemsize
    inv_count = 1.0 / float(N * HW)

    # ---------------- Pass 1: per-channel batch statistics -> (scale, bias) ----
    c_blk = _choose_c_block(C, itemsize)
    num_c = C // c_blk
    hw1 = _choose_hw_tile(HW, c_blk, itemsize, pass1_target)
    num_t1 = pl.cdiv(HW, hw1)
    mask_tail = (HW % hw1) != 0

    def stats_kernel(x_ref, g_ref, b_ref, scale_ref, bias_ref, sum_acc, sq_acc):
        n = pl.program_id(1)
        t = pl.program_id(2)

        @pl.when(jnp.logical_and(n == 0, t == 0))
        def _():
            sum_acc[...] = jnp.zeros_like(sum_acc)
            sq_acc[...] = jnp.zeros_like(sq_acc)

        x = x_ref[0].astype(jnp.float32)                     # (c_blk, hw1)
        if mask_tail:
            # Zero out-of-range lanes of the tail tile before reducing.
            lane = jax.lax.broadcasted_iota(jnp.int32, x.shape, 1)
            x = jnp.where(lane < HW - t * hw1, x, 0.0)
        sum_acc[...] += jnp.sum(x, axis=-1, keepdims=True)
        sq_acc[...] += jnp.sum(x * x, axis=-1, keepdims=True)

        @pl.when(jnp.logical_and(n == pl.num_programs(1) - 1,
                                 t == pl.num_programs(2) - 1))
        def _():
            mean = sum_acc[...] * inv_count
            var = sq_acc[...] * inv_count - mean * mean      # biased (training BN)
            inv_std = jax.lax.rsqrt(jnp.maximum(var, 0.0) + eps)
            scale = g_ref[...] * inv_std
            scale_ref[...] = scale
            bias_ref[...] = b_ref[...] - mean * scale

    stats_cost = pl.CostEstimate(flops=3 * N * C * HW,
                                 transcendentals=C,
                                 bytes_accessed=N * C * HW * itemsize + 16 * C)

    scale, bias = pl.pallas_call(
        stats_kernel,
        out_shape=(jax.ShapeDtypeStruct((C, 1), jnp.float32),
                   jax.ShapeDtypeStruct((C, 1), jnp.float32)),
        grid_spec=pltpu.PrefetchScalarGridSpec(
            num_scalar_prefetch=0,
            grid=(num_c, N, num_t1),
            in_specs=[
                pl.BlockSpec((1, c_blk, hw1), lambda c, n, t: (n, c, t)),
                pl.BlockSpec((c_blk, 1), lambda c, n, t: (c, 0)),
                pl.BlockSpec((c_blk, 1), lambda c, n, t: (c, 0)),
            ],
            out_specs=[
                pl.BlockSpec((c_blk, 1), lambda c, n, t: (c, 0)),
                pl.BlockSpec((c_blk, 1), lambda c, n, t: (c, 0)),
            ],
            scratch_shapes=[pltpu.VMEM((c_blk, 1), jnp.float32),
                            pltpu.VMEM((c_blk, 1), jnp.float32)],
        ),
        compiler_params=pltpu.CompilerParams(
            dimension_semantics=("parallel", "arbitrary", "arbitrary"),
            vmem_limit_bytes=vmem_limit),
        cost_estimate=stats_cost,
    )(x3, gamma2d, beta2d)

    # ---------------- Pass 2: normalize + affine + ReLU ------------------------
    hw2 = _choose_hw_tile(HW, C, itemsize, pass2_target)
    num_t2 = pl.cdiv(HW, hw2)
    compute_dtype = jnp.bfloat16 if x3.dtype == jnp.bfloat16 else jnp.float32

    def norm_kernel(x_ref, scale_ref, bias_ref, o_ref):
        sc = scale_ref[...].astype(compute_dtype)            # (C, 1)
        bs = bias_ref[...].astype(compute_dtype)
        y = x_ref[0].astype(compute_dtype) * sc + bs         # broadcasts over lanes
        o_ref[0] = jnp.maximum(y, 0).astype(o_ref.dtype)     # tail OOB stores dropped

    norm_cost = pl.CostEstimate(flops=3 * N * C * HW,
                                transcendentals=0,
                                bytes_accessed=2 * N * C * HW * itemsize)

    out3 = pl.pallas_call(
        norm_kernel,
        out_shape=jax.ShapeDtypeStruct((N, C, HW), x3.dtype),
        grid_spec=pltpu.PrefetchScalarGridSpec(
            num_scalar_prefetch=0,
            grid=(N, num_t2),
            in_specs=[
                pl.BlockSpec((1, C, hw2), lambda n, t: (n, 0, t)),
                pl.BlockSpec((C, 1), lambda n, t: (0, 0)),
                pl.BlockSpec((C, 1), lambda n, t: (0, 0)),
            ],
            out_specs=pl.BlockSpec((1, C, hw2), lambda n, t: (n, 0, t)),
        ),
        compiler_params=pltpu.CompilerParams(
            dimension_semantics=("parallel", "parallel"),
            vmem_limit_bytes=vmem_limit),
        cost_estimate=norm_cost,
    )(x3, scale, bias)

    return out3


# --------------------------------------------------------------------------- #
# Wrapper
# --------------------------------------------------------------------------- #
def batchnorm_relu_2d(x_nchw, gamma, beta, eps=EPS, force_two_pass=False,
                      pass1_target_bytes=None, pass2_target_bytes=None):
    """x_nchw: (N, C, H, W); gamma, beta: (C,). Returns relu(batchnorm(x))."""
    N, C, H, W = x_nchw.shape
    HW = H * W
    itemsize = jnp.dtype(x_nchw.dtype).itemsize

    # Pure reshape (no data movement): channel-major tiles DMA directly from NCHW.
    x3 = x_nchw.reshape(N, C, HW)
    gamma2d = gamma.reshape(C, 1).astype(jnp.float32)
    beta2d = beta.reshape(C, 1).astype(jnp.float32)

    # Generation-aware VMEM budgets.
    cap = max(_vmem_capacity_bytes(), 16 << 20)
    vmem_limit = min(int(cap * 0.75), 96 << 20)
    if pass1_target_bytes is None:
        pass1_target_bytes = min(8 << 20, vmem_limit // 6)   # input-only pipeline
    if pass2_target_bytes is None:
        pass2_target_bytes = min(4 << 20, vmem_limit // 10)  # input + output pipeline

    act_bytes = N * C * HW * itemsize
    fused_footprint = 2 * act_bytes + 2 * C * HW * 4 + (1 << 20)
    use_fused = (not force_two_pass) and \
        fused_footprint <= min(int(cap * 0.7), vmem_limit)

    if use_fused:
        out3 = _fused_bn_relu(x3, gamma2d, beta2d, eps, vmem_limit)
    else:
        out3 = _two_pass_bn_relu(x3, gamma2d, beta2d, eps, vmem_limit,
                                 pass1_target_bytes, pass2_target_bytes)
    return out3.reshape(N, C, H, W)


# --------------------------------------------------------------------------- #
# Pure-JAX reference
# --------------------------------------------------------------------------- #
def reference(x_nchw, gamma, beta, eps=EPS):
    x = x_nchw.astype(jnp.float32)
    mean = jnp.mean(x, axis=(0, 2, 3), keepdims=True)
    var = jnp.mean((x - mean) ** 2, axis=(0, 2, 3), keepdims=True)
    y = (x - mean) / jnp.sqrt(var + eps)
    y = y * gamma.reshape(1, -1, 1, 1) + beta.reshape(1, -1, 1, 1)
    return jnp.maximum(y, 0.0).astype(x_nchw.dtype)


if __name__ == "__main__":
    key = jax.random.PRNGKey(0)
    k_x, k_g, k_b, k_x2, k_g2, k_b2 = jax.random.split(key, 6)

    # Case 1: small activation -> fused VMEM-resident path.
    N, C, H, W = 2, 4, 16, 16
    x = jax.random.normal(k_x, (N, C, H, W), dtype=jnp.float32)
    gamma = 1.0 + 0.1 * jax.random.normal(k_g, (C,), dtype=jnp.float32)
    beta = 0.1 * jax.random.normal(k_b, (C,), dtype=jnp.float32)
    ref = reference(x, gamma, beta)

    out_fused = jax.block_until_ready(batchnorm_relu_2d(x, gamma, beta))
    assert out_fused.shape == (N, C, H, W)
    assert jnp.allclose(out_fused, ref, atol=1e-4, rtol=1e-3), "fused path mismatch"

    # Case 2: same inputs through the streaming two-pass path.
    out_stream = jax.block_until_ready(
        batchnorm_relu_2d(x, gamma, beta, force_two_pass=True))
    assert jnp.allclose(out_stream, ref, atol=1e-4, rtol=1e-3), "two-pass mismatch"

    # Case 3: exercise channel-block parallel stats grid + cdiv tiling with a
    # masked tail tile (HW = 400 not a multiple of 128) by forcing tiny tiles.
    N2, C2, H2, W2 = 2, 16, 20, 20
    x2 = jax.random.normal(k_x2, (N2, C2, H2, W2), dtype=jnp.float32)
    g2 = 1.0 + 0.1 * jax.random.normal(k_g2, (C2,), dtype=jnp.float32)
    b2 = 0.1 * jax.random.normal(k_b2, (C2,), dtype=jnp.float32)
    out_tiled = jax.block_until_ready(
        batchnorm_relu_2d(x2, g2, b2, force_two_pass=True,
                          pass1_target_bytes=4096, pass2_target_bytes=4096))
    assert jnp.allclose(out_tiled, reference(x2, g2, b2),
                        atol=1e-4, rtol=1e-3), "tiled two-pass mismatch"

    print("KERNEL_OK")
</pallas_src>

<mosaic_0001>
module attributes {stable_mosaic.version = 11 : i64} {
  func.func @kernel(%arg0: memref<2x4x256xf32, #tpu.memory_space<vmem>>, %arg1: memref<4x1xf32, #tpu.memory_space<vmem>>, %arg2: memref<4x1xf32, #tpu.memory_space<vmem>>, %arg3: memref<2x4x256xf32, #tpu.memory_space<vmem>>) attributes {dimension_semantics = [], scalar_prefetch = 0 : i64, scratch_operands = 0 : i64, tpu.core_type = #tpu.core_type<tc>} {
    %cst = arith.constant 0.000000e+00 : f32
    %0 = vector.broadcast %cst : f32 to vector<4x1xf32>
    %c0_i32 = arith.constant 0 : i32
    %c2_i32 = arith.constant 2 : i32
    %1 = arith.addi %c0_i32, %c2_i32 : i32
    %c1_i32 = arith.constant 1 : i32
    %2:2 = scf.for %arg4 = %c0_i32 to %1 step %c1_i32 iter_args(%arg5 = %0, %arg6 = %0) -> (vector<4x1xf32>, vector<4x1xf32>)  : i32 {
      %20 = arith.index_cast %arg4 : i32 to index
      %c0_12 = arith.constant 0 : index
      %c0_13 = arith.constant 0 : index
      %21 = vector.load %arg0[%20, %c0_12, %c0_13] : memref<2x4x256xf32, #tpu.memory_space<vmem>>, vector<1x4x256xf32>
      %22 = vector.shape_cast %21 : vector<1x4x256xf32> to vector<4x256xf32>
      %cst_14 = arith.constant dense<0.000000e+00> : vector<4xf32>
      %23 = vector.multi_reduction <add>, %22, %cst_14 [1] : vector<4x256xf32> to vector<4xf32>
      %24 = vector.shape_cast %23 : vector<4xf32> to vector<4x1xf32>
      %25 = arith.addf %arg5, %24 : vector<4x1xf32>
      %26 = arith.mulf %22, %22 : vector<4x256xf32>
      %cst_15 = arith.constant dense<0.000000e+00> : vector<4xf32>
      %27 = vector.multi_reduction <add>, %26, %cst_15 [1] : vector<4x256xf32> to vector<4xf32>
      %28 = vector.shape_cast %27 : vector<4xf32> to vector<4x1xf32>
      %29 = arith.addf %arg6, %28 : vector<4x1xf32>
      scf.yield %25, %29 : vector<4x1xf32>, vector<4x1xf32>
    }
    %c2_i32_0 = arith.constant 2 : i32
    %cst_1 = arith.constant 0.001953125 : f32
    %3 = vector.broadcast %cst_1 : f32 to vector<4x1xf32>
    %4 = arith.mulf %2#0, %3 : vector<4x1xf32>
    %cst_2 = arith.constant 0.001953125 : f32
    %5 = vector.broadcast %cst_2 : f32 to vector<4x1xf32>
    %6 = arith.mulf %2#1, %5 : vector<4x1xf32>
    %7 = arith.mulf %4, %4 : vector<4x1xf32>
    %8 = arith.subf %6, %7 : vector<4x1xf32>
    %cst_3 = arith.constant 0.000000e+00 : f32
    %9 = vector.broadcast %cst_3 : f32 to vector<4x1xf32>
    %10 = arith.maximumf %8, %9 : vector<4x1xf32>
    %cst_4 = arith.constant 9.99999974E-6 : f32
    %11 = vector.broadcast %cst_4 : f32 to vector<4x1xf32>
    %12 = arith.addf %10, %11 : vector<4x1xf32>
    %13 = math.rsqrt %12 : vector<4x1xf32>
    %c0 = arith.constant 0 : index
    %c0_5 = arith.constant 0 : index
    %14 = vector.load %arg1[%c0, %c0_5] : memref<4x1xf32, #tpu.memory_space<vmem>>, vector<4x1xf32>
    %15 = arith.mulf %14, %13 : vector<4x1xf32>
    %c0_6 = arith.constant 0 : index
    %c0_7 = arith.constant 0 : index
    %16 = vector.load %arg2[%c0_6, %c0_7] : memref<4x1xf32, #tpu.memory_space<vmem>>, vector<4x1xf32>
    %17 = arith.mulf %4, %15 : vector<4x1xf32>
    %18 = arith.subf %16, %17 : vector<4x1xf32>
    %c0_i32_8 = arith.constant 0 : i32
    %c2_i32_9 = arith.constant 2 : i32
    %19 = arith.addi %c0_i32_8, %c2_i32_9 : i32
    %c1_i32_10 = arith.constant 1 : i32
    scf.for %arg4 = %c0_i32_8 to %19 step %c1_i32_10  : i32 {
      %20 = arith.index_cast %arg4 : i32 to index
      %c0_12 = arith.constant 0 : index
      %c0_13 = arith.constant 0 : index
      %21 = vector.load %arg0[%20, %c0_12, %c0_13] : memref<2x4x256xf32, #tpu.memory_space<vmem>>, vector<1x4x256xf32>
      %22 = vector.shape_cast %21 : vector<1x4x256xf32> to vector<4x256xf32>
      %23 = vector.broadcast %15 : vector<4x1xf32> to vector<4x256xf32>
      %24 = arith.mulf %22, %23 : vector<4x256xf32>
      %25 = vector.broadcast %18 : vector<4x1xf32> to vector<4x256xf32>
      %26 = arith.addf %24, %25 : vector<4x256xf32>
      %cst_14 = arith.constant 0.000000e+00 : f32
      %27 = vector.broadcast %cst_14 : f32 to vector<4x256xf32>
      %28 = arith.maximumf %26, %27 : vector<4x256xf32>
      %29 = arith.index_cast %arg4 : i32 to index
      %c0_15 = arith.constant 0 : index
      %c0_16 = arith.constant 0 : index
      %30 = vector.load %arg3[%29, %c0_15, %c0_16] : memref<2x4x256xf32, #tpu.memory_space<vmem>>, vector<1x4x256xf32>
      %31 = vector.shape_cast %30 : vector<1x4x256xf32> to vector<4x256xf32>
      %32 = vector.shape_cast %28 : vector<4x256xf32> to vector<1x4x256xf32>
      tpu.vector_store %arg3[%29, %c0_15, %c0_16], %32 {strides = array<i32>} : memref<2x4x256xf32, #tpu.memory_space<vmem>>, vector<1x4x256xf32>,
    }
    %c2_i32_11 = arith.constant 2 : i32
    return
  }
}

</mosaic_0001>

<llo_original>
// kernel: tpu_custom_call.1
$region0: #{tpu_custom_call.1}
  #allocation0 [shape = 'u32[]', space=smem, size = 0x4, offset = 0x4, fixed_abs, tag = 'smem constant byte address 0x4 - core index']
  #allocation1 [shape = 'u32[144,128]{1,0:T(1,128)}', space=vmem, size = 0x12000, scoped, tag = 'internal scratch']
  %s0 = inlined_call_operand.hbm [shape: f32[2,4,256], index: 0, kind: input, shape index: {}]
  %s1 = inlined_call_operand.vmem [shape: f32[4,1], index: 1, kind: input, shape index: {}]
  %s2 = inlined_call_operand.vmem [shape: f32[4,1], index: 2, kind: input, shape index: {}]
  %s3 = inlined_call_operand.hbm [shape: f32[2,4,256], index: 3, kind: output, shape index: {}]
  %s4 = sld [smem:[#allocation0]]
  $region40: #{tpu_custom_call.1} parent=0
    _
  %s6 = ssub.s32 1, %s4
  %s7 = scalar_select 0, %s6, %s4
  $region1: #{tpu_custom_call.1} parent=0
    #allocation2 [shape = 'u8[8192]{0}', space=vmem, size = 0x2000, scoped, tag = 'input window, operand 0, single buffered']
    #allocation3 [shape = 's32[1]{0}', space=sflag, size = 0x4, scoped, tag = 'scoped memory for tpu_custom_call.1']
    #allocation4 [shape = 's32[1]{0}', space=sflag, size = 0x4, scoped, tag = 'scoped memory for tpu_custom_call.1']
    #allocation5 [shape = 'u8[8192]{0}', space=vmem, size = 0x2000, scoped, tag = 'output window, operand 0, single buffered']
    %8 = vsyncpa [#allocation3], 0
    %9 = vsyncpa [#allocation4], 0
    // Predicated region
    $region2: #{tpu_custom_call.1} parent=1 // pred_check
      _
    $region3: #{tpu_custom_call.1} parent=1 // pred_check_branch
      %11 = sbr.rel (0) target = $region5
    $region4: #{tpu_custom_call.1} parent=1 // pred_region
      %s13 = ssub.s32 256, 256
      %14 = vsyncadd [#allocation3], %s13
      %s15 = sshll.u32 [#allocation2], 4
      %s16 = int_to_ptr.vmem [resolvable:$true] %s15
      %21 = dma.hbm_to_vmem [thread:$0]  %s0, 256, %s16, [#allocation3], 128, 128, 8
    $region5: #{tpu_custom_call.1} parent=1 // pred_fallthru
      _
    // Predicated region
    $region6: #{tpu_custom_call.1} parent=1 // pred_check
      _
    $region7: #{tpu_custom_call.1} parent=1 // pred_check_branch
      %23 = sbr.rel (0) target = $region9
    $region8: #{tpu_custom_call.1} parent=1 // pred_region
      _
    $region9: #{tpu_custom_call.1} parent=1 // pred_fallthru
      _
    // Predicated region
    $region10: #{tpu_custom_call.1} parent=1 // pred_check
      _
    $region11: #{tpu_custom_call.1} parent=1 // pred_check_branch
      %25 = sbr.rel (0) target = $region13
    $region12: #{tpu_custom_call.1} parent=1 // pred_region
      _
    $region13: #{tpu_custom_call.1} parent=1 // pred_fallthru
      _
    // Predicated region
    $region14: #{tpu_custom_call.1} parent=1 // pred_check
      _
    $region15: #{tpu_custom_call.1} parent=1 // pred_check_branch
      %27 = sbr.rel (0) target = $region17
    $region16: #{tpu_custom_call.1} parent=1 // pred_region
      %28 = dma.done [#allocation3], 256
    $region17: #{tpu_custom_call.1} parent=1 // pred_fallthru
      _
    loop: start=0, step=1, limit=2
    $region18: #{tpu_custom_call.1} parent=1 // loop_pre_header
      _
    $region19: #{tpu_custom_call.1} parent=1 // loop_header
      %s30 = sphi 0, %s34
      %p31 = scmp.ge.s32.totalorder %s30, 2
      %v35 = vphi 0.0, %v50
      %v36 = vphi 0.0, %v60
    $region20: #{tpu_custom_call.1} parent=1 // loop_header_branch
      %33 = sbr.rel (%p31) target = $region24
    $region21: #{tpu_custom_call.1} parent=1 // loop_body
      %s37 = smul.u32 %s30, 2
      %s38 = smul.addr %s37, 4
      %s39 = scalar_lea.vmem [#allocation2], %s38
      %v40 = vld [vmem:[%s39] sm:$0xff]
      %v42 = vcombine.high %v40, %v40
      %vm44 = vcmask 1043456
      %v45 = vsel %vm44, %v40, 0.0
      %v46 = vsel %vm44, %v42, 0.0
      %v47 = vadd.f32 %v45, %v46
      %48 = vadd.xlane.f32.xlu0 %v47
      %v49 = vpop.xlane.xlu0 %48
      %v50 = vadd.f32 %v35, %v49
      %v51 = vmul.f32 %v40, %v40
      %v53 = vcombine.high %v51, %v51
      %v55 = vsel %vm44, %v51, 0.0
      %v56 = vsel %vm44, %v53, 0.0
      %v57 = vadd.f32 %v55, %v56
      %58 = vadd.xlane.f32.xlu0 %v57
      %v59 = vpop.xlane.xlu0 %58
      %v60 = vadd.f32 %v36, %v59
    $region22: #{tpu_custom_call.1} parent=1 // loop_footer
      %s34 = sadd.s32 1, %s30
    $region23: #{tpu_custom_call.1} parent=1 // loop_footer_branch
      %29 = sbr.rel target = $region19
    $region24: #{tpu_custom_call.1} parent=1 // loop_exit
      _
    %v61 = vmul.f32 %v35, 0.001953125
    %v62 = vmul.f32 %v36, 0.001953125
    %v63 = vmul.f32 %v61, %v61
    %v64 = vsub.f32 %v62, %v63
    %v65 = vmax.f32 %v64, 0.0
    %v66 = vadd.f32 %v65, 1e-05
    %v67 = vrsqrt.pop %v66
    %v68 = vld [vmem:[%s1] sm:$0xf]
    %v69 = vmul.f32 %v68, %v67
    %v70 = vld [vmem:[%s2] sm:$0xf]
    %v71 = vmul.f32 %v61, %v69
    %v72 = vsub.f32 %v70, %v71
    loop: start=0, step=1, limit=2
    $region25: #{tpu_custom_call.1} parent=1 // loop_pre_header
      _
    $region26: #{tpu_custom_call.1} parent=1 // loop_header
      %s74 = sphi 0, %s78
      %p75 = scmp.ge.s32.totalorder %s74, 2
    $region27: #{tpu_custom_call.1} parent=1 // loop_header_branch
      %77 = sbr.rel (%p75) target = $region31
    $region28: #{tpu_custom_call.1} parent=1 // loop_body
      %s79 = smul.u32 %s74, 2
      %s80 = smul.addr %s79, 4
      %s81 = scalar_lea.vmem [#allocation2], %s80
      %v82 = vld [vmem:[%s81] sm:$0xff]
      %84 = vset.pattern.permute.xlu0 0
      %85 = vperm.xlu0 %84, %v69
      %v86 = vpop.permute.xlu0 %85
      %v88 = vunpack.c.l.s4 839922192
      %v89 = vunpack.c.0.s8 %v88
      %v90 = vlaneseq
      %v91 = vshrl.u32 %v90, 7
      %v92 = vsub.s32 %v89, %v91
      %v93 = vrot.slane %v86, %v92
      %v95 = vmul.f32 %v82, %v93
      %97 = vset.pattern.permute.xlu0 0
      %98 = vperm.xlu0 %97, %v72
      %v99 = vpop.permute.xlu0 %98
      %v101 = vunpack.c.l.s4 839922192
      %v102 = vunpack.c.0.s8 %v101
      %v103 = vlaneseq
      %v104 = vshrl.u32 %v103, 7
      %v105 = vsub.s32 %v102, %v104
      %v106 = vrot.slane %v99, %v105
      %v108 = vadd.f32 %v95, %v106
      %v109 = vmax.f32 %v108, 0.0
      %s110 = smul.addr %s79, 4
      %s111 = scalar_lea.vmem [#allocation5], %s110
      %112 = vst [vmem:[%s111] sm:$0xff] %v109
    $region29: #{tpu_custom_call.1} parent=1 // loop_footer
      %s78 = sadd.s32 1, %s74
    $region30: #{tpu_custom_call.1} parent=1 // loop_footer_branch
      %73 = sbr.rel target = $region26
    $region31: #{tpu_custom_call.1} parent=1 // loop_exit
      _
    // Predicated region
    $region32: #{tpu_custom_call.1} parent=1 // pred_check
      _
    $region33: #{tpu_custom_call.1} parent=1 // pred_check_branch
      %114 = sbr.rel (0) target = $region35
    $region34: #{tpu_custom_call.1} parent=1 // pred_region
      %s116 = ssub.s32 256, 256
      %117 = vsyncadd [#allocation4], %s116
      %s118 = sshll.u32 [#allocation5], 4
      %s119 = int_to_ptr.vmem [resolvable:$true] %s118
      %124 = dma.vmem_to_hbm [thread:$0]  %s119, 256, %s3, [#allocation4], 128, 128, 8
    $region35: #{tpu_custom_call.1} parent=1 // pred_fallthru
      _
    // Predicated region
    $region36: #{tpu_custom_call.1} parent=1 // pred_check
      _
    $region37: #{tpu_custom_call.1} parent=1 // pred_check_branch
      %126 = sbr.rel (0) target = $region39
    $region38: #{tpu_custom_call.1} parent=1 // pred_region
      %127 = dma.done [#allocation4], 256
    $region39: #{tpu_custom_call.1} parent=1 // pred_fallthru
      _
    %128 = vsyncpa [#allocation3], 1
    %129 = vsyncpa [#allocation4], 1

</llo_original>
